<compile_context>
chip_gen: v6e
topology: v6e:2x2x1
jax: 0.10.0
libtpu: 0.0.40
codegen_flags: <defaults>
</compile_context>

<pallas_src>
import jax
import jax.numpy as jnp
from jax.experimental import pallas as pl
from jax.experimental.pallas import tpu as pltpu


_LANES = 128       # lane width of a vreg
_MAX_ROWS = 256    # sublane-rows per block (per channel): 256*128 px ~= 131 KiB f32


def _adjust_hue_kernel(flag_ref, factor_ref, img_ref, out_ref):
    """Block = (B_TILE, 3, TR, 128) RGB pixels; flag/factor live in SMEM."""

    # --- Bernoulli gate not taken: just clone the tile, no HSV math at all ---
    @pl.when(flag_ref[0] == 0)
    def _copy():
        out_ref[...] = img_ref[...]

    # --- Bernoulli gate taken: rgb -> hsv -> (h + factor) mod 1 -> rgb ---
    @pl.when(flag_ref[0] != 0)
    def _adjust():
        x = img_ref[...]
        r = x[:, 0].astype(jnp.float32)
        g = x[:, 1].astype(jnp.float32)
        b = x[:, 2].astype(jnp.float32)

        # rgb -> hsv (mirrors torchvision._rgb2hsv)
        maxc = jnp.maximum(jnp.maximum(r, g), b)
        minc = jnp.minimum(jnp.minimum(r, g), b)
        eqc = maxc == minc
        cr = maxc - minc
        ones = jnp.ones_like(maxc)
        # divides -> EUP reciprocals (separate VLIW slot; kernel is VALU-bound)
        inv_max = pl.reciprocal(jnp.where(eqc, ones, maxc), approx=True)
        inv_cr = pl.reciprocal(jnp.where(eqc, ones, cr), approx=True)
        s = cr * inv_max
        rc = (maxc - r) * inv_cr
        gc = (maxc - g) * inv_cr
        bc = (maxc - b) * inv_cr

        is_r = maxc == r
        is_g = maxc == g
        h = jnp.where(is_r, bc - gc,
                      jnp.where(is_g, 2.0 + rc - bc, 4.0 + gc - rc))
        v = maxc

        # hue shift; single mod is equivalent to fmod(h/6+1,1) then (.+f) mod 1
        hue = jnp.mod(h * (1.0 / 6.0) + 1.0 + factor_ref[0], 1.0)

        # hsv -> rgb (mirrors torchvision._hsv2rgb)
        h6 = hue * 6.0
        i_f = jnp.floor(h6)          # in {0,...,5} since hue < 1: no int cast / %6
        f = h6 - i_f
        p_ = jnp.clip(v * (1.0 - s), 0.0, 1.0)
        q_ = jnp.clip(v * (1.0 - s * f), 0.0, 1.0)
        t_ = jnp.clip(v * (1.0 - s * (1.0 - f)), 0.0, 1.0)

        # hoist the sector masks once; reuse for all three channels
        m0 = i_f == 0.0
        m1 = i_f == 1.0
        m2 = i_f == 2.0
        m3 = i_f == 3.0
        m4 = i_f == 4.0

        def pick(c0, c1, c2, c3, c4, c5):
            out = jnp.where(m0, c0, c5)      # default (sector 5) as the base
            out = jnp.where(m1, c1, out)
            out = jnp.where(m2, c2, out)
            out = jnp.where(m3, c3, out)
            return jnp.where(m4, c4, out)

        odt = out_ref.dtype
        out_ref[:, 0, :, :] = pick(v, q_, p_, p_, t_, v).astype(odt)
        out_ref[:, 1, :, :] = pick(t_, v, v, q_, p_, p_).astype(odt)
        out_ref[:, 2, :, :] = pick(p_, p_, t_, v, v, q_).astype(odt)


def random_adjust_color(image, key, p, factor, target=None):
    """JAX/Pallas equivalent of RandomAdjustColor.forward.

    Returns (image_out, target, applied_flag) like the PyTorch module.
    """
    assert image.ndim == 4 and image.shape[1] == 3, "expected NCHW RGB image"
    N, C, H, W = image.shape

    # Host-side Bernoulli(p) draw (== `torch.rand(1) < p`)
    applied = jax.random.uniform(key, ()) < p
    flag = applied.astype(jnp.int32).reshape(1)
    fac = jnp.full((1,), factor, dtype=jnp.float32)

    # ---- lane-dense spatial tiling: (N, 3, H*W) -> (N, 3, rows, 128) ----
    hw = H * W
    tr = min(_MAX_ROWS, pl.cdiv(hw, _LANES))     # sublane-rows per block
    chunk = tr * _LANES                          # pixels per row-tile
    hw_pad = pl.cdiv(hw, chunk) * chunk          # rows is a multiple of tr
    flat = image.reshape(N, C, hw)
    if hw_pad != hw:
        flat = jnp.pad(flat, ((0, 0), (0, 0), (0, hw_pad - hw)))
    rows = hw_pad // _LANES
    x4 = flat.reshape(N, C, rows, _LANES)
    n_row_tiles = rows // tr

    # Batch small images per grid step to amortize per-step overhead.
    b_tile = 1
    if n_row_tiles == 1:
        for cand in range(1, N + 1):
            if N % cand == 0 and cand * tr <= _MAX_ROWS:
                b_tile = cand

    grid = (N // b_tile, n_row_tiles)
    block = (b_tile, C, tr, _LANES)
    idx = lambda n, t, *_: (n, 0, t, 0)          # *_ absorbs scalar-prefetch refs

    out4 = pl.pallas_call(
        _adjust_hue_kernel,
        out_shape=jax.ShapeDtypeStruct(x4.shape, image.dtype),
        grid_spec=pltpu.PrefetchScalarGridSpec(
            num_scalar_prefetch=2,               # flag, hue factor -> SMEM
            grid=grid,
            in_specs=[pl.BlockSpec(block, idx)],
            out_specs=pl.BlockSpec(block, idx),
        ),
        compiler_params=pltpu.CompilerParams(
            dimension_semantics=("parallel", "parallel"),
            vmem_limit_bytes=32 * 1024 * 1024,
        ),
    )(flag, fac, x4)

    out = out4.reshape(N, C, hw_pad)[:, :, :hw].reshape(N, C, H, W)
    # TODO(synk): could additionally donate `image` via input_output_aliases to
    # save the extra HBM allocation (writeback itself is unavoidable here).
    return out, target, applied


if __name__ == "__main__":
    key = jax.random.PRNGKey(0)
    k_img, k_bern = jax.random.split(key)

    # small deterministic RGB image batch, values in [0, 1]
    image = jax.random.uniform(k_img, (2, 3, 16, 16), dtype=jnp.float32)

    # module params (from __init__): p, factor  (factor must be in [-0.5, 0.5])
    p = 0.5
    factor = 0.25

    out, target, applied = random_adjust_color(image, k_bern, p=p, factor=factor)
    jax.block_until_ready(out)
    print("KERNEL_OK")
</pallas_src>

<mosaic_0001>
module attributes {stable_mosaic.version = 11 : i64} {
  func.func @_adjust_hue_kernel(%arg0: i32, %arg1: i32, %arg2: memref<1xi32, #tpu.memory_space<smem>>, %arg3: memref<1xf32, #tpu.memory_space<smem>>, %arg4: memref<2x3x2x128xf32, #tpu.memory_space<vmem>>, %arg5: memref<2x3x2x128xf32, #tpu.memory_space<vmem>>) attributes {dimension_semantics = [#tpu.dimension_semantics<parallel>, #tpu.dimension_semantics<parallel>], iteration_bounds = array<i64: 1, 1>, scalar_prefetch = 2 : i64, scratch_operands = 0 : i64, tpu.core_type = #tpu.core_type<tc>, window_params = [{transform_indices = @transform_0, window_bounds = array<i64: 2, 3, 2, 128>}, {transform_indices = @transform_1, window_bounds = array<i64: 2, 3, 2, 128>}]} {
    %c0 = arith.constant 0 : index
    %0 = memref.load %arg2[%c0] : memref<1xi32, #tpu.memory_space<smem>>
    %c0_i32 = arith.constant 0 : i32
    %1 = arith.cmpi eq, %0, %c0_i32 : i32
    %2 = arith.extui %1 : i1 to i32
    %c0_i32_0 = arith.constant 0 : i32
    %3 = arith.cmpi ne, %2, %c0_i32_0 : i32
    scf.if %3 {
      %c0_4 = arith.constant 0 : index
      %c0_5 = arith.constant 0 : index
      %c0_6 = arith.constant 0 : index
      %c0_7 = arith.constant 0 : index
      %8 = vector.load %arg4[%c0_4, %c0_5, %c0_6, %c0_7] : memref<2x3x2x128xf32, #tpu.memory_space<vmem>>, vector<2x3x2x128xf32>
      %c0_8 = arith.constant 0 : index
      %c0_9 = arith.constant 0 : index
      %c0_10 = arith.constant 0 : index
      %c0_11 = arith.constant 0 : index
      %9 = vector.load %arg5[%c0_8, %c0_9, %c0_10, %c0_11] : memref<2x3x2x128xf32, #tpu.memory_space<vmem>>, vector<2x3x2x128xf32>
      tpu.vector_store %arg5[%c0_8, %c0_9, %c0_10, %c0_11], %8 {strides = array<i32>} : memref<2x3x2x128xf32, #tpu.memory_space<vmem>>, vector<2x3x2x128xf32>,
    } else {
    }
    %c0_1 = arith.constant 0 : index
    %4 = memref.load %arg2[%c0_1] : memref<1xi32, #tpu.memory_space<smem>>
    %c0_i32_2 = arith.constant 0 : i32
    %5 = arith.cmpi ne, %4, %c0_i32_2 : i32
    %6 = arith.extui %5 : i1 to i32
    %c0_i32_3 = arith.constant 0 : i32
    %7 = arith.cmpi ne, %6, %c0_i32_3 : i32
    scf.if %7 {
      %c0_4 = arith.constant 0 : index
      %c0_5 = arith.constant 0 : index
      %c0_6 = arith.constant 0 : index
      %c0_7 = arith.constant 0 : index
      %8 = vector.load %arg4[%c0_4, %c0_5, %c0_6, %c0_7] : memref<2x3x2x128xf32, #tpu.memory_space<vmem>>, vector<2x3x2x128xf32>
      %9 = vector.extract_strided_slice %8 {offsets = [0, 0, 0, 0], sizes = [2, 1, 2, 128], strides = [1, 1, 1, 1]} : vector<2x3x2x128xf32> to vector<2x1x2x128xf32>
      %10 = vector.shape_cast %9 : vector<2x1x2x128xf32> to vector<2x2x128xf32>
      %11 = vector.extract_strided_slice %8 {offsets = [0, 1, 0, 0], sizes = [2, 1, 2, 128], strides = [1, 1, 1, 1]} : vector<2x3x2x128xf32> to vector<2x1x2x128xf32>
      %12 = vector.shape_cast %11 : vector<2x1x2x128xf32> to vector<2x2x128xf32>
      %13 = vector.extract_strided_slice %8 {offsets = [0, 2, 0, 0], sizes = [2, 1, 2, 128], strides = [1, 1, 1, 1]} : vector<2x3x2x128xf32> to vector<2x1x2x128xf32>
      %14 = vector.shape_cast %13 : vector<2x1x2x128xf32> to vector<2x2x128xf32>
      %15 = arith.maximumf %10, %12 : vector<2x2x128xf32>
      %16 = arith.maximumf %15, %14 : vector<2x2x128xf32>
      %17 = arith.minimumf %10, %12 : vector<2x2x128xf32>
      %18 = arith.minimumf %17, %14 : vector<2x2x128xf32>
      %19 = arith.cmpf oeq, %16, %18 : vector<2x2x128xf32>
      %20 = arith.subf %16, %18 : vector<2x2x128xf32>
      %cst = arith.constant 1.000000e+00 : f32
      %21 = vector.broadcast %cst : f32 to vector<2x2x128xf32>
      %22 = arith.select %19, %21, %16 : vector<2x2x128xi1>, vector<2x2x128xf32>
      %23 = tpu.reciprocal %22 {approx = true} : vector<2x2x128xf32> -> vector<2x2x128xf32>
      %24 = arith.select %19, %21, %20 : vector<2x2x128xi1>, vector<2x2x128xf32>
      %25 = tpu.reciprocal %24 {approx = true} : vector<2x2x128xf32> -> vector<2x2x128xf32>
      %26 = arith.mulf %20, %23 : vector<2x2x128xf32>
      %27 = arith.subf %16, %10 : vector<2x2x128xf32>
      %28 = arith.mulf %27, %25 : vector<2x2x128xf32>
      %29 = arith.subf %16, %12 : vector<2x2x128xf32>
      %30 = arith.mulf %29, %25 : vector<2x2x128xf32>
      %31 = arith.subf %16, %14 : vector<2x2x128xf32>
      %32 = arith.mulf %31, %25 : vector<2x2x128xf32>
      %33 = arith.cmpf oeq, %16, %10 : vector<2x2x128xf32>
      %34 = arith.cmpf oeq, %16, %12 : vector<2x2x128xf32>
      %35 = arith.subf %32, %30 : vector<2x2x128xf32>
      %cst_8 = arith.constant 2.000000e+00 : f32
      %36 = vector.broadcast %cst_8 : f32 to vector<2x2x128xf32>
      %37 = arith.addf %36, %28 : vector<2x2x128xf32>
      %38 = arith.subf %37, %32 : vector<2x2x128xf32>
      %cst_9 = arith.constant 4.000000e+00 : f32
      %39 = vector.broadcast %cst_9 : f32 to vector<2x2x128xf32>
      %40 = arith.addf %39, %30 : vector<2x2x128xf32>
      %41 = arith.subf %40, %28 : vector<2x2x128xf32>
      %42 = arith.select %34, %38, %41 : vector<2x2x128xi1>, vector<2x2x128xf32>
      %43 = arith.select %33, %35, %42 : vector<2x2x128xi1>, vector<2x2x128xf32>
      %cst_10 = arith.constant 0.166666672 : f32
      %44 = vector.broadcast %cst_10 : f32 to vector<2x2x128xf32>
      %45 = arith.mulf %43, %44 : vector<2x2x128xf32>
      %cst_11 = arith.constant 1.000000e+00 : f32
      %46 = vector.broadcast %cst_11 : f32 to vector<2x2x128xf32>
      %47 = arith.addf %45, %46 : vector<2x2x128xf32>
      %c0_12 = arith.constant 0 : index
      %48 = memref.load %arg3[%c0_12] : memref<1xf32, #tpu.memory_space<smem>>
      %49 = vector.broadcast %48 : f32 to vector<2x2x128xf32>
      %50 = arith.addf %47, %49 : vector<2x2x128xf32>
      %cst_13 = arith.constant 1.000000e+00 : f32
      %51 = vector.broadcast %cst_13 : f32 to vector<2x2x128xf32>
      %52 = arith.remf %50, %51 : vector<2x2x128xf32>
      %cst_14 = arith.constant 0.000000e+00 : f32
      %53 = vector.broadcast %cst_14 : f32 to vector<2x2x128xf32>
      %54 = arith.cmpf one, %52, %53 : vector<2x2x128xf32>
      %cst_15 = arith.constant 0.000000e+00 : f32
      %55 = vector.broadcast %cst_15 : f32 to vector<2x2x128xf32>
      %56 = arith.cmpf olt, %52, %55 : vector<2x2x128xf32>
      %cst_16 = arith.constant 0.000000e+00 : f32
      %57 = arith.cmpf olt, %cst_13, %cst_16 : f32
      %58 = vector.broadcast %57 : i1 to vector<2x2x128xi1>
      %59 = vector.broadcast %58 : vector<2x2x128xi1> to vector<2x2x128xi1>
      %60 = arith.xori %56, %59 : vector<2x2x128xi1>
      %61 = arith.andi %60, %54 : vector<2x2x128xi1>
      %62 = vector.broadcast %cst_13 : f32 to vector<2x2x128xf32>
      %63 = arith.addf %52, %62 : vector<2x2x128xf32>
      %64 = arith.select %61, %63, %52 : vector<2x2x128xi1>, vector<2x2x128xf32>
      %cst_17 = arith.constant 6.000000e+00 : f32
      %65 = vector.broadcast %cst_17 : f32 to vector<2x2x128xf32>
      %66 = arith.mulf %64, %65 : vector<2x2x128xf32>
      %67 = math.floor %66 : vector<2x2x128xf32>
      %68 = arith.subf %66, %67 : vector<2x2x128xf32>
      %cst_18 = arith.constant 1.000000e+00 : f32
      %69 = vector.broadcast %cst_18 : f32 to vector<2x2x128xf32>
      %70 = arith.subf %69, %26 : vector<2x2x128xf32>
      %71 = arith.mulf %16, %70 : vector<2x2x128xf32>
      %cst_19 = arith.constant 0.000000e+00 : f32
      %cst_20 = arith.constant 1.000000e+00 : f32
      %72 = vector.broadcast %cst_19 : f32 to vector<2x2x128xf32>
      %73 = arith.maximumf %72, %71 : vector<2x2x128xf32>
      %74 = vector.broadcast %cst_20 : f32 to vector<2x2x128xf32>
      %75 = arith.minimumf %74, %73 : vector<2x2x128xf32>
      %76 = arith.mulf %26, %68 : vector<2x2x128xf32>
      %cst_21 = arith.constant 1.000000e+00 : f32
      %77 = vector.broadcast %cst_21 : f32 to vector<2x2x128xf32>
      %78 = arith.subf %77, %76 : vector<2x2x128xf32>
      %79 = arith.mulf %16, %78 : vector<2x2x128xf32>
      %cst_22 = arith.constant 0.000000e+00 : f32
      %cst_23 = arith.constant 1.000000e+00 : f32
      %80 = vector.broadcast %cst_22 : f32 to vector<2x2x128xf32>
      %81 = arith.maximumf %80, %79 : vector<2x2x128xf32>
      %82 = vector.broadcast %cst_23 : f32 to vector<2x2x128xf32>
      %83 = arith.minimumf %82, %81 : vector<2x2x128xf32>
      %cst_24 = arith.constant 1.000000e+00 : f32
      %84 = vector.broadcast %cst_24 : f32 to vector<2x2x128xf32>
      %85 = arith.subf %84, %68 : vector<2x2x128xf32>
      %86 = arith.mulf %26, %85 : vector<2x2x128xf32>
      %cst_25 = arith.constant 1.000000e+00 : f32
      %87 = vector.broadcast %cst_25 : f32 to vector<2x2x128xf32>
      %88 = arith.subf %87, %86 : vector<2x2x128xf32>
      %89 = arith.mulf %16, %88 : vector<2x2x128xf32>
      %cst_26 = arith.constant 0.000000e+00 : f32
      %cst_27 = arith.constant 1.000000e+00 : f32
      %90 = vector.broadcast %cst_26 : f32 to vector<2x2x128xf32>
      %91 = arith.maximumf %90, %89 : vector<2x2x128xf32>
      %92 = vector.broadcast %cst_27 : f32 to vector<2x2x128xf32>
      %93 = arith.minimumf %92, %91 : vector<2x2x128xf32>
      %cst_28 = arith.constant 0.000000e+00 : f32
      %94 = vector.broadcast %cst_28 : f32 to vector<2x2x128xf32>
      %95 = arith.cmpf oeq, %67, %94 : vector<2x2x128xf32>
      %cst_29 = arith.constant 1.000000e+00 : f32
      %96 = vector.broadcast %cst_29 : f32 to vector<2x2x128xf32>
      %97 = arith.cmpf oeq, %67, %96 : vector<2x2x128xf32>
      %cst_30 = arith.constant 2.000000e+00 : f32
      %98 = vector.broadcast %cst_30 : f32 to vector<2x2x128xf32>
      %99 = arith.cmpf oeq, %67, %98 : vector<2x2x128xf32>
      %cst_31 = arith.constant 3.000000e+00 : f32
      %100 = vector.broadcast %cst_31 : f32 to vector<2x2x128xf32>
      %101 = arith.cmpf oeq, %67, %100 : vector<2x2x128xf32>
      %cst_32 = arith.constant 4.000000e+00 : f32
      %102 = vector.broadcast %cst_32 : f32 to vector<2x2x128xf32>
      %103 = arith.cmpf oeq, %67, %102 : vector<2x2x128xf32>
      %104 = arith.select %95, %16, %16 : vector<2x2x128xi1>, vector<2x2x128xf32>
      %105 = arith.select %97, %83, %104 : vector<2x2x128xi1>, vector<2x2x128xf32>
      %106 = arith.select %99, %75, %105 : vector<2x2x128xi1>, vector<2x2x128xf32>
      %107 = arith.select %101, %75, %106 : vector<2x2x128xi1>, vector<2x2x128xf32>
      %108 = arith.select %103, %93, %107 : vector<2x2x128xi1>, vector<2x2x128xf32>
      %c0_33 = arith.constant 0 : index
      %c0_34 = arith.constant 0 : index
      %c0_35 = arith.constant 0 : index
      %c0_36 = arith.constant 0 : index
      %109 = vector.load %arg5[%c0_33, %c0_34, %c0_35, %c0_36] : memref<2x3x2x128xf32, #tpu.memory_space<vmem>>, vector<2x1x2x128xf32>
      %110 = vector.shape_cast %109 : vector<2x1x2x128xf32> to vector<2x2x128xf32>
      %111 = vector.shape_cast %108 : vector<2x2x128xf32> to vector<2x1x2x128xf32>
      tpu.vector_store %arg5[%c0_33, %c0_34, %c0_35, %c0_36], %111 {strides = array<i32>} : memref<2x3x2x128xf32, #tpu.memory_space<vmem>>, vector<2x1x2x128xf32>,
      %112 = arith.select %95, %93, %75 : vector<2x2x128xi1>, vector<2x2x128xf32>
      %113 = arith.select %97, %16, %112 : vector<2x2x128xi1>, vector<2x2x128xf32>
      %114 = arith.select %99, %16, %113 : vector<2x2x128xi1>, vector<2x2x128xf32>
      %115 = arith.select %101, %83, %114 : vector<2x2x128xi1>, vector<2x2x128xf32>
      %116 = arith.select %103, %75, %115 : vector<2x2x128xi1>, vector<2x2x128xf32>
      %c0_37 = arith.constant 0 : index
      %c1 = arith.constant 1 : index
      %c0_38 = arith.constant 0 : index
      %c0_39 = arith.constant 0 : index
      %117 = vector.load %arg5[%c0_37, %c1, %c0_38, %c0_39] : memref<2x3x2x128xf32, #tpu.memory_space<vmem>>, vector<2x1x2x128xf32>
      %118 = vector.shape_cast %117 : vector<2x1x2x128xf32> to vector<2x2x128xf32>
      %119 = vector.shape_cast %116 : vector<2x2x128xf32> to vector<2x1x2x128xf32>
      tpu.vector_store %arg5[%c0_37, %c1, %c0_38, %c0_39], %119 {strides = array<i32>} : memref<2x3x2x128xf32, #tpu.memory_space<vmem>>, vector<2x1x2x128xf32>,
      %120 = arith.select %95, %75, %83 : vector<2x2x128xi1>, vector<2x2x128xf32>
      %121 = arith.select %97, %75, %120 : vector<2x2x128xi1>, vector<2x2x128xf32>
      %122 = arith.select %99, %93, %121 : vector<2x2x128xi1>, vector<2x2x128xf32>
      %123 = arith.select %101, %16, %122 : vector<2x2x128xi1>, vector<2x2x128xf32>
      %124 = arith.select %103, %16, %123 : vector<2x2x128xi1>, vector<2x2x128xf32>
      %c0_40 = arith.constant 0 : index
      %c2 = arith.constant 2 : index
      %c0_41 = arith.constant 0 : index
      %c0_42 = arith.constant 0 : index
      %125 = vector.load %arg5[%c0_40, %c2, %c0_41, %c0_42] : memref<2x3x2x128xf32, #tpu.memory_space<vmem>>, vector<2x1x2x128xf32>
      %126 = vector.shape_cast %125 : vector<2x1x2x128xf32> to vector<2x2x128xf32>
      %127 = vector.shape_cast %124 : vector<2x2x128xf32> to vector<2x1x2x128xf32>
      tpu.vector_store %arg5[%c0_40, %c2, %c0_41, %c0_42], %127 {strides = array<i32>} : memref<2x3x2x128xf32, #tpu.memory_space<vmem>>, vector<2x1x2x128xf32>,
    } else {
    }
    return
  }
  func.func @transform_0(%arg0: i32, %arg1: i32, %arg2: memref<1xi32, #tpu.memory_space<smem>>, %arg3: memref<1xf32, #tpu.memory_space<smem>>) -> (i32, i32, i32, i32) {
    %c0_i32 = arith.constant 0 : i32
    %c0_i32_0 = arith.constant 0 : i32
    %c0_i32_1 = arith.constant 0 : i32
    return %arg0, %c0_i32, %arg1, %c0_i32_0 : i32, i32, i32, i32
  }
  func.func @transform_1(%arg0: i32, %arg1: i32, %arg2: memref<1xi32, #tpu.memory_space<smem>>, %arg3: memref<1xf32, #tpu.memory_space<smem>>) -> (i32, i32, i32, i32) {
    %c0_i32 = arith.constant 0 : i32
    %c0_i32_0 = arith.constant 0 : i32
    %c0_i32_1 = arith.constant 0 : i32
    return %arg0, %c0_i32, %arg1, %c0_i32_0 : i32, i32, i32, i32
  }
}

</mosaic_0001>

<llo_original>
// kernel: tpu_custom_call.1
$region0: #{tpu_custom_call.1}
  #allocation0 [shape = 'u32[]', space=smem, size = 0x4, offset = 0x4, fixed_abs, tag = 'smem constant byte address 0x4 - core index']
  #allocation1 [shape = 'u32[144,128]{1,0:T(1,128)}', space=vmem, size = 0x12000, scoped, tag = 'internal scratch']
  #allocation2 [shape = 's32[1]{0}', space=sflag, size = 0x4, scoped, tag = 'scoped memory for tpu_custom_call.1']
  #allocation3 [shape = 's32[1]{0:T(128)S(6)}', space=smem, size = 0x200, scoped, tag = 'prefetched SMEM operand 0']
  #allocation4 [shape = 'f32[1]{0:T(128)S(6)}', space=smem, size = 0x200, scoped, tag = 'prefetched SMEM operand 1']
  %s0 = inlined_call_operand.<no memory space> [shape: s32[1], index: 0, kind: input, shape index: {}]
  %s1 = inlined_call_operand.<no memory space> [shape: f32[1], index: 1, kind: input, shape index: {}]
  %s2 = inlined_call_operand.hbm [shape: f32[2,3,2,128], index: 2, kind: input, shape index: {}]
  %s3 = inlined_call_operand.hbm [shape: f32[2,3,2,128], index: 3, kind: output, shape index: {}]
  %s4 = sld [smem:[#allocation0]]
  $region26: #{tpu_custom_call.1} parent=0
    _
  %s6 = ssub.s32 1, %s4
  %s7 = scalar_select 0, %s6, %s4
  %8 = sst [smem:[#allocation3]] %s0
  %9 = sst [smem:[#allocation4]] %s1
  $region1: #{tpu_custom_call.1} parent=0
    #allocation5 [shape = 'u8[6144]{0}', space=vmem, size = 0x1800, scoped, tag = 'input window, operand 2, single buffered']
    #allocation6 [shape = 's32[1]{0}', space=sflag, size = 0x4, scoped, tag = 'scoped memory for tpu_custom_call.1']
    #allocation7 [shape = 's32[1]{0}', space=sflag, size = 0x4, scoped, tag = 'scoped memory for tpu_custom_call.1']
    #allocation8 [shape = 'u8[6144]{0}', space=vmem, size = 0x1800, scoped, tag = 'output window, operand 0, single buffered']
    %10 = vsyncpa [#allocation6], 0
    %11 = vsyncpa [#allocation7], 0
    // Predicated region
    $region2: #{tpu_custom_call.1} parent=1 // pred_check
      _
    $region3: #{tpu_custom_call.1} parent=1 // pred_check_branch
      %13 = sbr.rel (0) target = $region5
    $region4: #{tpu_custom_call.1} parent=1 // pred_region
      %s15 = ssub.s32 192, 192
      %16 = vsyncadd [#allocation6], %s15
      %s17 = sshll.u32 [#allocation5], 4
      %s18 = int_to_ptr.vmem [resolvable:$true] %s17
      %23 = dma.hbm_to_vmem [thread:$0]  %s2, 192, %s18, [#allocation6], 32, 32, 2
    $region5: #{tpu_custom_call.1} parent=1 // pred_fallthru
      _
    // Predicated region
    $region6: #{tpu_custom_call.1} parent=1 // pred_check
      _
    $region7: #{tpu_custom_call.1} parent=1 // pred_check_branch
      %25 = sbr.rel (0) target = $region9
    $region8: #{tpu_custom_call.1} parent=1 // pred_region
      %26 = dma.done [#allocation6], 192
    $region9: #{tpu_custom_call.1} parent=1 // pred_fallthru
      _
    %s27 = sld [smem:[#allocation3]]
    %p28 = scmp.eq.s32.totalorder %s27, 0
    // Predicated region
    $region10: #{tpu_custom_call.1} parent=1 // pred_check
      %p29 = pneg %p28
    $region11: #{tpu_custom_call.1} parent=1 // pred_check_branch
      %31 = sbr.rel (%p29) target = $region13
    $region12: #{tpu_custom_call.1} parent=1 // pred_region
      %v32 = vld [vmem:[#allocation5] sm:$0x3]
      %v33 = vld [vmem:[#allocation5 + $0x2] sm:$0x3]
      %v34 = vld [vmem:[#allocation5 + $0x4] sm:$0x3]
      %v35 = vld [vmem:[#allocation5 + $0x6] sm:$0x3]
      %v36 = vld [vmem:[#allocation5 + $0x8] sm:$0x3]
      %v37 = vld [vmem:[#allocation5 + $0xa] sm:$0x3]
      %38 = vst [vmem:[#allocation8] sm:$0x3] %v32
      %39 = vst [vmem:[#allocation8 + $0x2] sm:$0x3] %v33
      %40 = vst [vmem:[#allocation8 + $0x4] sm:$0x3] %v34
      %41 = vst [vmem:[#allocation8 + $0x6] sm:$0x3] %v35
      %42 = vst [vmem:[#allocation8 + $0x8] sm:$0x3] %v36
      %43 = vst [vmem:[#allocation8 + $0xa] sm:$0x3] %v37
    $region13: #{tpu_custom_call.1} parent=1 // pred_fallthru
      _
    %s44 = sld [smem:[#allocation3]]
    %p45 = scmp.ne.s32.totalorder %s44, 0
    // Predicated region
    $region14: #{tpu_custom_call.1} parent=1 // pred_check
      %p46 = pneg %p45
    $region15: #{tpu_custom_call.1} parent=1 // pred_check_branch
      %48 = sbr.rel (%p46) target = $region17
    $region16: #{tpu_custom_call.1} parent=1 // pred_region
      %v49 = vld [vmem:[#allocation5] sm:$0x3]
      %v50 = vld [vmem:[#allocation5 + $0x2] sm:$0x3]
      %v51 = vld [vmem:[#allocation5 + $0x4] sm:$0x3]
      %v52 = vld [vmem:[#allocation5 + $0x6] sm:$0x3]
      %v53 = vld [vmem:[#allocation5 + $0x8] sm:$0x3]
      %v54 = vld [vmem:[#allocation5 + $0xa] sm:$0x3]
      %v55 = vmax.f32 %v49, %v50
      %v56 = vmax.f32 %v52, %v53
      %v57 = vmax.f32 %v55, %v51
      %v58 = vmax.f32 %v56, %v54
      %v59 = vmin.f32 %v49, %v50
      %v60 = vmin.f32 %v52, %v53
      %v61 = vmin.f32 %v59, %v51
      %v62 = vmin.f32 %v60, %v54
      %vm63 = vcmp.eq.f32.partialorder %v57, %v61
      %vm64 = vcmp.eq.f32.partialorder %v58, %v62
      %v65 = vsub.f32 %v57, %v61
      %v66 = vsub.f32 %v58, %v62
      %v67 = vsel %vm63, 1.0, %v57
      %v68 = vsel %vm64, 1.0, %v58
      %v69 = vrcp.pop %v67
      %v70 = vrcp.pop %v68
      %v71 = vsel %vm63, 1.0, %v65
      %v72 = vsel %vm64, 1.0, %v66
      %v73 = vrcp.pop %v71
      %v74 = vrcp.pop %v72
      %v75 = vmul.f32 %v65, %v69
      %v76 = vmul.f32 %v66, %v70
      %v77 = vsub.f32 %v57, %v49
      %v78 = vsub.f32 %v58, %v52
      %v79 = vmul.f32 %v77, %v73
      %v80 = vmul.f32 %v78, %v74
      %v81 = vsub.f32 %v57, %v50
      %v82 = vsub.f32 %v58, %v53
      %v83 = vmul.f32 %v81, %v73
      %v84 = vmul.f32 %v82, %v74
      %v85 = vsub.f32 %v57, %v51
      %v86 = vsub.f32 %v58, %v54
      %v87 = vmul.f32 %v85, %v73
      %v88 = vmul.f32 %v86, %v74
      %vm89 = vcmp.eq.f32.partialorder %v57, %v49
      %vm90 = vcmp.eq.f32.partialorder %v58, %v52
      %vm91 = vcmp.eq.f32.partialorder %v57, %v50
      %vm92 = vcmp.eq.f32.partialorder %v58, %v53
      %v93 = vsub.f32 %v87, %v83
      %v94 = vsub.f32 %v88, %v84
      %v95 = vadd.f32 %v79, 2.0
      %v96 = vadd.f32 %v80, 2.0
      %v97 = vsub.f32 %v95, %v87
      %v98 = vsub.f32 %v96, %v88
      %v99 = vadd.f32 %v83, 4.0
      %v100 = vadd.f32 %v84, 4.0
      %v101 = vsub.f32 %v99, %v79
      %v102 = vsub.f32 %v100, %v80
      %v103 = vsel %vm91, %v97, %v101
      %v104 = vsel %vm92, %v98, %v102
      %v105 = vsel %vm89, %v93, %v103
      %v106 = vsel %vm90, %v94, %v104
      %v107 = vmul.f32 %v105, 0.16666667
      %v108 = vmul.f32 %v106, 0.16666667
      %v109 = vadd.f32 %v107, 1.0
      %v110 = vadd.f32 %v108, 1.0
      %s111 = sld [smem:[#allocation4]]
      %v112 = vstv %s111
      %v113 = vadd.f32 %v109, %v112
      %v114 = vadd.f32 %v110, %v112
      %v115 = vand.u32 2147483647, %v113
      %v116 = vrcp.pop 1.0
      %v117 = vmul.f32 %v115, %v116
      %v118 = vfloor.f32 %v117
      %v119 = vsub.f32 %v115, %v118
      %vm120 = vcmp.eq.f32.partialorder %v119, 1.0
      %v121 = vsel %vm120, 0.0, %v119
      %v122 = vand.u32 2147483647, %v121
      %v123 = vand.u32 %v113, 2147483648
      %v124 = vor.u32 %v122, %v123
      %v125 = vand.u32 2147483647, %v114
      %v126 = vrcp.pop 1.0
      %v127 = vmul.f32 %v125, %v126
      %v128 = vfloor.f32 %v127
      %v129 = vsub.f32 %v125, %v128
      %vm130 = vcmp.eq.f32.partialorder %v129, 1.0
      %v131 = vsel %vm130, 0.0, %v129
      %v132 = vand.u32 2147483647, %v131
      %v133 = vand.u32 %v114, 2147483648
      %v134 = vor.u32 %v132, %v133
      %vm135 = vcmp.ne.f32.partialorder %v124, 0.0
      %vm136 = vcmp.ne.f32.partialorder %v134, 0.0
      %vm137 = vcmp.lt.f32.partialorder %v124, 0.0
      %vm138 = vcmp.lt.f32.partialorder %v134, 0.0
      %vm139 = vmand %vm137, %vm135
      %vm140 = vmand %vm138, %vm136
      %v141 = vadd.f32 %v124, 1.0
      %v142 = vadd.f32 %v134, 1.0
      %v143 = vsel %vm139, %v141, %v124
      %v144 = vsel %vm140, %v142, %v134
      %v145 = vmul.f32 %v143, 6.0
      %v146 = vmul.f32 %v144, 6.0
      %v147 = vfloor.f32 %v145
      %v148 = vfloor.f32 %v146
      %v149 = vsub.f32 %v145, %v147
      %v150 = vsub.f32 %v146, %v148
      %v151 = vsub.f32 1.0, %v75
      %v152 = vsub.f32 1.0, %v76
      %v153 = vmul.f32 %v57, %v151
      %v154 = vmul.f32 %v58, %v152
      %v155 = vmax.f32 %v153, 0.0
      %v156 = vmax.f32 %v154, 0.0
      %v157 = vmin.f32 %v155, 1.0
      %v158 = vmin.f32 %v156, 1.0
      %v159 = vmul.f32 %v75, %v149
      %v160 = vmul.f32 %v76, %v150
      %v161 = vsub.f32 1.0, %v159
      %v162 = vsub.f32 1.0, %v160
      %v163 = vmul.f32 %v57, %v161
      %v164 = vmul.f32 %v58, %v162
      %v165 = vmax.f32 %v163, 0.0
      %v166 = vmax.f32 %v164, 0.0
      %v167 = vmin.f32 %v165, 1.0
      %v168 = vmin.f32 %v166, 1.0
      %v169 = vsub.f32 1.0, %v149
      %v170 = vsub.f32 1.0, %v150
      %v171 = vmul.f32 %v75, %v169
      %v172 = vmul.f32 %v76, %v170
      %v173 = vsub.f32 1.0, %v171
      %v174 = vsub.f32 1.0, %v172
      %v175 = vmul.f32 %v57, %v173
      %v176 = vmul.f32 %v58, %v174
      %v177 = vmax.f32 %v175, 0.0
      %v178 = vmax.f32 %v176, 0.0
      %v179 = vmin.f32 %v177, 1.0
      %v180 = vmin.f32 %v178, 1.0
      %vm181 = vcmp.eq.f32.partialorder %v147, 0.0
      %vm182 = vcmp.eq.f32.partialorder %v148, 0.0
      %vm183 = vcmp.eq.f32.partialorder %v147, 1.0
      %vm184 = vcmp.eq.f32.partialorder %v148, 1.0
      %vm185 = vcmp.eq.f32.partialorder %v147, 2.0
      %vm186 = vcmp.eq.f32.partialorder %v148, 2.0
      %vm187 = vcmp.eq.f32.partialorder %v147, 3.0
      %vm188 = vcmp.eq.f32.partialorder %v148, 3.0
      %vm189 = vcmp.eq.f32.partialorder %v147, 4.0
      %vm190 = vcmp.eq.f32.partialorder %v148, 4.0
      %v191 = vsel %vm183, %v167, %v57
      %v192 = vsel %vm184, %v168, %v58
      %v193 = vsel %vm185, %v157, %v191
      %v194 = vsel %vm186, %v158, %v192
      %v195 = vsel %vm187, %v157, %v193
      %v196 = vsel %vm188, %v158, %v194
      %v197 = vsel %vm189, %v179, %v195
      %v198 = vsel %vm190, %v180, %v196
      %199 = vst [vmem:[#allocation8] sm:$0x3] %v197
      %200 = vst [vmem:[#allocation8 + $0x6] sm:$0x3] %v198
      %v201 = vsel %vm181, %v179, %v157
      %v202 = vsel %vm182, %v180, %v158
      %v203 = vsel %vm183, %v57, %v201
      %v204 = vsel %vm184, %v58, %v202
      %v205 = vsel %vm185, %v57, %v203
      %v206 = vsel %vm186, %v58, %v204
      %v207 = vsel %vm187, %v167, %v205
      %v208 = vsel %vm188, %v168, %v206
      %v209 = vsel %vm189, %v157, %v207
      %v210 = vsel %vm190, %v158, %v208
      %s211 = scalar_lea.vmem [#allocation8], 2
      %212 = vst [vmem:[%s211] sm:$0x3] %v209
      %213 = vst [vmem:[%s211 + $0x6] sm:$0x3] %v210
      %v214 = vsel %vm181, %v157, %v167
      %v215 = vsel %vm182, %v158, %v168
      %v216 = vsel %vm183, %v157, %v214
      %v217 = vsel %vm184, %v158, %v215
      %v218 = vsel %vm185, %v179, %v216
      %v219 = vsel %vm186, %v180, %v217
      %v220 = vsel %vm187, %v57, %v218
      %v221 = vsel %vm188, %v58, %v219
      %v222 = vsel %vm189, %v57, %v220
      %v223 = vsel %vm190, %v58, %v221
      %s224 = scalar_lea.vmem [#allocation8], 4
      %225 = vst [vmem:[%s224] sm:$0x3] %v222
      %226 = vst [vmem:[%s224 + $0x6] sm:$0x3] %v223
    $region17: #{tpu_custom_call.1} parent=1 // pred_fallthru
      _
    // Predicated region
    $region18: #{tpu_custom_call.1} parent=1 // pred_check
      _
    $region19: #{tpu_custom_call.1} parent=1 // pred_check_branch
      %228 = sbr.rel (0) target = $region21
    $region20: #{tpu_custom_call.1} parent=1 // pred_region
      %s230 = ssub.s32 192, 192
      %231 = vsyncadd [#allocation7], %s230
      %s232 = sshll.u32 [#allocation8], 4
      %s233 = int_to_ptr.vmem [resolvable:$true] %s232
      %238 = dma.vmem_to_hbm [thread:$0]  %s233, 192, %s3, [#allocation7], 32, 32, 2
    $region21: #{tpu_custom_call.1} parent=1 // pred_fallthru
      _
    // Predicated region
    $region22: #{tpu_custom_call.1} parent=1 // pred_check
      _
    $region23: #{tpu_custom_call.1} parent=1 // pred_check_branch
      %240 = sbr.rel (0) target = $region25
    $region24: #{tpu_custom_call.1} parent=1 // pred_region
      %241 = dma.done [#allocation7], 192
    $region25: #{tpu_custom_call.1} parent=1 // pred_fallthru
      _
    %242 = vsyncpa [#allocation6], 1
    %243 = vsyncpa [#allocation7], 1

</llo_original>
